<compile_context>
chip_gen: v5e
topology: v5e:2x2
jax: 0.10.0
libtpu: 0.0.40
codegen_flags: <defaults>
</compile_context>

<pallas_src>
import jax
import jax.numpy as jnp
from jax.experimental import pallas as pl
from jax.experimental.pallas import tpu as pltpu

# ----------------------------- problem sizes --------------------------------
VOCAB = 50          # len(vocab)
NUM_CLASSES = 5     # len(vocab.output_cats)
EMB = 16            # embedding_dim
HID = 32            # hidden_size
BATCH = 2
SEQ = 8

BP = 8              # batch padded to the f32 sublane count (tile-aligned rows)
VPAD = 128          # 2*VOCAB = 100 padded up to a full lane width
LANE = 128          # lane-dense classifier output width


# ------------------------------ Pallas kernel -------------------------------
def bilstm_kernel(idx_f_ref, idx_b_ref, table_ref, whh_ref, wp_ref, bp_ref,
                  out_ref):
    TB = idx_f_ref.shape[0]              # T * BP
    B = out_ref.shape[0]                 # BP
    T = TB // B
    VP = table_ref.shape[0]              # padded 2*vocab
    H8 = table_ref.shape[1]              # 8 * H  (gate columns)
    H2 = H8 // 4                         # 2 * H  (state width, fwd|bwd)

    # --- fused embedding gather + fwd/bwd input projection + bias -----------
    # One one-hot MXU matmul over the precomputed projection table.
    # Row t*B + b of z_in = x[t,b] @ W_f + x[T-1-t,b] @ W_b + bias
    # (g-gate columns pre-scaled by 2 for the sigmoid-only activation below).
    lanes = jax.lax.broadcasted_iota(jnp.int32, (TB, VP), 1)
    hit = jnp.logical_or(lanes == idx_f_ref[...], lanes == idx_b_ref[...])
    onehot = jnp.where(hit, 1.0, 0.0).astype(jnp.bfloat16)
    z_in = jnp.dot(onehot, table_ref[...], preferred_element_type=jnp.float32)

    whh = whh_ref[...]                   # (2H, 8H) block-diagonal, bf16, resident

    # State carried in vregs; lane layout [fwd 0:H | bwd H:2H].
    h = jnp.zeros((B, H2), jnp.float32)
    c = jnp.zeros((B, H2), jnp.float32)

    # Fully unrolled recurrence (T static & small).  Each step: one tile-
    # aligned (BP, 8H) slice, one (BP,2H)x(2H,8H) bf16 MXU call with a
    # loop-invariant RHS, one full-width 256-lane sigmoid, vreg elementwise.
    for t in range(T):
        z = z_in[t * B:(t + 1) * B]                            # (BP, 8H) tile-aligned
        z = z + jnp.dot(h.astype(jnp.bfloat16), whh,
                        preferred_element_type=jnp.float32)
        s = jax.nn.sigmoid(z)                                  # one full-width EUP pass
        # Gate column layout: [i_f,i_b | f_f,f_b | o_f,o_b | g_f,g_b]
        i = s[:, 0 * H2:1 * H2]
        f = s[:, 1 * H2:2 * H2]
        o = s[:, 2 * H2:3 * H2]
        g = 2.0 * s[:, 3 * H2:4 * H2] - 1.0                    # tanh(x)=2*sig(2x)-1
        c = f * c + i * g
        h = o * jnp.tanh(c)

    # h is already [h_fwd_final | h_bwd_final] == torch.cat([h_n[0], h_n[1]], -1).
    # TODO(synk): nn.Dropout applied as identity (eval-mode semantics).
    # Lane-dense (BP, 128) store; wrapper slices [:BATCH, :NUM_CLASSES].
    out_ref[...] = (jnp.dot(h.astype(jnp.bfloat16), wp_ref[...],
                            preferred_element_type=jnp.float32) + bp_ref[...])


# ------------------------- one-time weight fusion ----------------------------
def _gate_blocks(w):
    """PyTorch (4H, D) weight -> per-gate (D, H) blocks in i, f, g, o order."""
    i, f, g, o = jnp.split(w, 4, axis=0)
    return i.T, f.T, g.T, o.T


def fuse_params(params):
    """Run ONCE per model: precompute all fused/padded kernel operands."""
    H, E, V, C = HID, EMB, VOCAB, NUM_CLASSES

    # Gate-column layout: [i_f,i_b | f_f,f_b | o_f,o_b | g_f,g_b]
    i_f, f_f, g_f, o_f = _gate_blocks(params["wih_f"])          # (E, H) each
    i_b, f_b, g_b, o_b = _gate_blocks(params["wih_b"])
    ze = jnp.zeros((E, H), jnp.float32)
    w_in_f = jnp.concatenate([i_f, ze, f_f, ze, o_f, ze, g_f, ze], axis=1)  # (E, 8H)
    w_in_b = jnp.concatenate([ze, i_b, ze, f_b, ze, o_b, ze, g_b], axis=1)  # (E, 8H)

    bfwd = params["bih_f"] + params["bhh_f"]
    bbwd = params["bih_b"] + params["bhh_b"]
    bi_f, bf_f, bg_f, bo_f = jnp.split(bfwd, 4)
    bi_b, bf_b, bg_b, bo_b = jnp.split(bbwd, 4)
    b_fused = jnp.concatenate(
        [bi_f, bi_b, bf_f, bf_b, bo_f, bo_b, bg_f, bg_b])[None, :]          # (1, 8H)

    # Projection table: embedding gather + input projection folded together.
    emb = params["embedding"]                                    # (V, E)
    table_f = emb @ w_in_f + b_fused                             # bias folded ONCE here
    table_b = emb @ w_in_b
    table = jnp.zeros((VPAD, 8 * H), jnp.float32)
    table = table.at[:V].set(table_f).at[V:2 * V].set(table_b)

    ih_f, fh_f, gh_f, oh_f = _gate_blocks(params["whh_f"])       # (H, H) each
    ih_b, fh_b, gh_b, oh_b = _gate_blocks(params["whh_b"])
    zh = jnp.zeros((H, H), jnp.float32)
    whh = jnp.concatenate([
        jnp.concatenate([ih_f, zh, fh_f, zh, oh_f, zh, gh_f, zh], axis=1),
        jnp.concatenate([zh, ih_b, zh, fh_b, zh, oh_b, zh, gh_b], axis=1),
    ], axis=0)                                                   # (2H, 8H) block-diag

    # tanh(x) = 2*sigmoid(2x) - 1: pre-scale the g-gate columns by 2 so the
    # kernel can run a single full-width sigmoid over all gates.
    table = table.at[:, 6 * H:].multiply(2.0)
    whh = whh.at[:, 6 * H:].multiply(2.0)

    # Lane-dense classifier: pad (2H, C) -> (2H, 128), (C,) -> (1, 128).
    wp = jnp.zeros((2 * H, LANE), jnp.float32).at[:, :C].set(params["wp"].T)
    bp = jnp.zeros((1, LANE), jnp.float32).at[:, :C].set(params["bp"][None, :])

    return {
        "table": table.astype(jnp.bfloat16),   # (VPAD, 8H) bf16
        "whh": whh.astype(jnp.bfloat16),       # (2H, 8H)  bf16
        "wp": wp.astype(jnp.bfloat16),         # (2H, 128) bf16
        "bp": bp,                              # (1, 128)  f32 (post-matmul add)
    }


# ------------------------------ per-call wrapper ------------------------------
@jax.jit
def bilstm_forward(tokens, fused):
    B, T = tokens.shape
    # Tiny int glue only: pad batch to 8 sublanes, build time-major fwd/bwd
    # index columns (bwd indices pre-offset into the second half of the table).
    tok_pad = jnp.zeros((BP, T), jnp.int32).at[:B].set(tokens)
    idx_f = tok_pad.T.reshape(T * BP, 1)                        # row t*BP+b -> tok[b,t]
    idx_b = (tok_pad[:, ::-1].T + VOCAB).reshape(T * BP, 1)     # -> tok[b,T-1-t] + V

    vmem = pl.BlockSpec(memory_space=pltpu.MemorySpace.VMEM)
    out = pl.pallas_call(
        bilstm_kernel,
        out_shape=jax.ShapeDtypeStruct((BP, LANE), jnp.float32),
        in_specs=[vmem] * 6,
        out_specs=vmem,
    )(idx_f, idx_b, fused["table"], fused["whh"], fused["wp"], fused["bp"])
    return out[:B, :NUM_CLASSES]


# --------------------------- pure-JAX reference ------------------------------
def bilstm_reference(tokens, params):
    emb = params["embedding"][tokens]              # (B, T, E)
    H = HID

    def direction(x_bte, wih, whh, bih, bhh):
        def step(carry, x_t):
            h, c = carry
            z = x_t @ wih.T + h @ whh.T + bih + bhh
            i = jax.nn.sigmoid(z[:, 0 * H:1 * H])
            f = jax.nn.sigmoid(z[:, 1 * H:2 * H])
            g = jnp.tanh(z[:, 2 * H:3 * H])
            o = jax.nn.sigmoid(z[:, 3 * H:4 * H])
            c = f * c + i * g
            h = o * jnp.tanh(c)
            return (h, c), None

        B = x_bte.shape[0]
        init = (jnp.zeros((B, H), jnp.float32), jnp.zeros((B, H), jnp.float32))
        (h, _), _ = jax.lax.scan(step, init, jnp.transpose(x_bte, (1, 0, 2)))
        return h

    h_fwd = direction(emb, params["wih_f"], params["whh_f"],
                      params["bih_f"], params["bhh_f"])
    h_bwd = direction(emb[:, ::-1, :], params["wih_b"], params["whh_b"],
                      params["bih_b"], params["bhh_b"])
    hcat = jnp.concatenate([h_fwd, h_bwd], axis=-1)
    return hcat @ params["wp"].T + params["bp"]


# ------------------------------ main ------------------------------------------
def make_params(key):
    ks = jax.random.split(key, 11)
    s = 1.0 / jnp.sqrt(HID)
    u = lambda k, shape: jax.random.uniform(k, shape, jnp.float32, -s, s)
    return {
        "embedding": jax.random.normal(ks[0], (VOCAB, EMB), jnp.float32),
        "wih_f": u(ks[1], (4 * HID, EMB)),
        "whh_f": u(ks[2], (4 * HID, HID)),
        "bih_f": u(ks[3], (4 * HID,)),
        "bhh_f": u(ks[4], (4 * HID,)),
        "wih_b": u(ks[5], (4 * HID, EMB)),
        "whh_b": u(ks[6], (4 * HID, HID)),
        "bih_b": u(ks[7], (4 * HID,)),
        "bhh_b": u(ks[8], (4 * HID,)),
        "wp": u(ks[9], (NUM_CLASSES, 2 * HID)),
        "bp": u(ks[10], (NUM_CLASSES,)),
    }


if __name__ == "__main__":
    key = jax.random.PRNGKey(0)
    pkey, tkey = jax.random.split(key)
    params = make_params(pkey)
    tokens = jax.random.randint(tkey, (BATCH, SEQ), 0, VOCAB, dtype=jnp.int32)

    fused = jax.block_until_ready(fuse_params(params))   # one-time precompute

    out = bilstm_forward(tokens, fused)
    out = jax.block_until_ready(out)

    ref = jax.block_until_ready(bilstm_reference(tokens, params))
    assert out.shape == (BATCH, NUM_CLASSES)
    # bf16 matmul operands (f32 accumulation) -> looser tolerance than f32 path.
    assert jnp.allclose(out, ref, atol=3e-2, rtol=3e-2), (out, ref)
    print("KERNEL_OK")
</pallas_src>

<mosaic_0001>
module attributes {stable_mosaic.version = 11 : i64} {
  func.func @bilstm_kernel(%arg0: memref<64x1xi32, #tpu.memory_space<vmem>>, %arg1: memref<64x1xi32, #tpu.memory_space<vmem>>, %arg2: memref<128x256xbf16, #tpu.memory_space<vmem>>, %arg3: memref<64x256xbf16, #tpu.memory_space<vmem>>, %arg4: memref<64x128xbf16, #tpu.memory_space<vmem>>, %arg5: memref<1x128xf32, #tpu.memory_space<vmem>>, %arg6: memref<8x128xf32, #tpu.memory_space<vmem>>) attributes {dimension_semantics = [], scalar_prefetch = 0 : i64, scratch_operands = 0 : i64, tpu.core_type = #tpu.core_type<tc>} {
    %0 = tpu.iota {dimensions = array<i32: 1>} : vector<64x128xi32>
    %c0 = arith.constant 0 : index
    %c0_0 = arith.constant 0 : index
    %1 = vector.load %arg0[%c0, %c0_0] : memref<64x1xi32, #tpu.memory_space<vmem>>, vector<64x1xi32>
    %2 = vector.broadcast %1 : vector<64x1xi32> to vector<64x128xi32>
    %3 = arith.cmpi eq, %0, %2 : vector<64x128xi32>
    %c0_1 = arith.constant 0 : index
    %c0_2 = arith.constant 0 : index
    %4 = vector.load %arg1[%c0_1, %c0_2] : memref<64x1xi32, #tpu.memory_space<vmem>>, vector<64x1xi32>
    %5 = vector.broadcast %4 : vector<64x1xi32> to vector<64x128xi32>
    %6 = arith.cmpi eq, %0, %5 : vector<64x128xi32>
    %7 = arith.ori %3, %6 : vector<64x128xi1>
    %cst = arith.constant 1.000000e+00 : f32
    %cst_3 = arith.constant 0.000000e+00 : f32
    %8 = vector.broadcast %cst : f32 to vector<64x128xf32>
    %9 = vector.broadcast %cst_3 : f32 to vector<64x128xf32>
    %10 = arith.select %7, %8, %9 : vector<64x128xi1>, vector<64x128xf32>
    %11 = arith.truncf %10 : vector<64x128xf32> to vector<64x128xbf16>
    %c0_4 = arith.constant 0 : index
    %c0_5 = arith.constant 0 : index
    %12 = vector.load %arg2[%c0_4, %c0_5] : memref<128x256xbf16, #tpu.memory_space<vmem>>, vector<128x256xbf16>
    %cst_6 = arith.constant dense<0.000000e+00> : vector<64x256xf32>
    %13 = tpu.matmul %11, %12, %cst_6 {dimension_numbers = #tpu.dot_dimension_numbers<[1], [0], [0], [1], [0, 0, 1, 1], [], []>} : vector<64x128xbf16>, vector<128x256xbf16>, vector<64x256xf32> -> vector<64x256xf32>
    %c0_7 = arith.constant 0 : index
    %c0_8 = arith.constant 0 : index
    %14 = vector.load %arg3[%c0_7, %c0_8] : memref<64x256xbf16, #tpu.memory_space<vmem>>, vector<64x256xbf16>
    %cst_9 = arith.constant 0.000000e+00 : f32
    %15 = vector.broadcast %cst_9 : f32 to vector<8x64xf32>
    %cst_10 = arith.constant 0.000000e+00 : f32
    %16 = vector.broadcast %cst_10 : f32 to vector<8x64xf32>
    %17 = vector.extract_strided_slice %13 {offsets = [0, 0], sizes = [8, 256], strides = [1, 1]} : vector<64x256xf32> to vector<8x256xf32>
    %18 = arith.truncf %15 : vector<8x64xf32> to vector<8x64xbf16>
    %cst_11 = arith.constant dense<0.000000e+00> : vector<8x256xf32>
    %19 = tpu.matmul %18, %14, %cst_11 {dimension_numbers = #tpu.dot_dimension_numbers<[1], [0], [0], [1], [0, 0, 1, 1], [], []>} : vector<8x64xbf16>, vector<64x256xbf16>, vector<8x256xf32> -> vector<8x256xf32>
    %20 = arith.addf %17, %19 : vector<8x256xf32>
    %21 = arith.negf %20 : vector<8x256xf32>
    %22 = math.exp %21 : vector<8x256xf32>
    %cst_12 = arith.constant 1.000000e+00 : f32
    %23 = vector.broadcast %cst_12 : f32 to vector<8x256xf32>
    %24 = arith.addf %23, %22 : vector<8x256xf32>
    %25 = arith.divf %23, %24 : vector<8x256xf32>
    %26 = vector.extract_strided_slice %25 {offsets = [0, 0], sizes = [8, 64], strides = [1, 1]} : vector<8x256xf32> to vector<8x64xf32>
    %27 = vector.extract_strided_slice %25 {offsets = [0, 64], sizes = [8, 64], strides = [1, 1]} : vector<8x256xf32> to vector<8x64xf32>
    %28 = vector.extract_strided_slice %25 {offsets = [0, 128], sizes = [8, 64], strides = [1, 1]} : vector<8x256xf32> to vector<8x64xf32>
    %29 = vector.extract_strided_slice %25 {offsets = [0, 192], sizes = [8, 64], strides = [1, 1]} : vector<8x256xf32> to vector<8x64xf32>
    %cst_13 = arith.constant 2.000000e+00 : f32
    %30 = vector.broadcast %cst_13 : f32 to vector<8x64xf32>
    %31 = arith.mulf %30, %29 : vector<8x64xf32>
    %cst_14 = arith.constant 1.000000e+00 : f32
    %32 = vector.broadcast %cst_14 : f32 to vector<8x64xf32>
    %33 = arith.subf %31, %32 : vector<8x64xf32>
    %34 = arith.mulf %27, %16 : vector<8x64xf32>
    %35 = arith.mulf %26, %33 : vector<8x64xf32>
    %36 = arith.addf %34, %35 : vector<8x64xf32>
    %37 = math.tanh %36 : vector<8x64xf32>
    %38 = arith.mulf %28, %37 : vector<8x64xf32>
    %39 = vector.extract_strided_slice %13 {offsets = [8, 0], sizes = [8, 256], strides = [1, 1]} : vector<64x256xf32> to vector<8x256xf32>
    %40 = arith.truncf %38 : vector<8x64xf32> to vector<8x64xbf16>
    %cst_15 = arith.constant dense<0.000000e+00> : vector<8x256xf32>
    %41 = tpu.matmul %40, %14, %cst_15 {dimension_numbers = #tpu.dot_dimension_numbers<[1], [0], [0], [1], [0, 0, 1, 1], [], []>} : vector<8x64xbf16>, vector<64x256xbf16>, vector<8x256xf32> -> vector<8x256xf32>
    %42 = arith.addf %39, %41 : vector<8x256xf32>
    %43 = arith.negf %42 : vector<8x256xf32>
    %44 = math.exp %43 : vector<8x256xf32>
    %cst_16 = arith.constant 1.000000e+00 : f32
    %45 = vector.broadcast %cst_16 : f32 to vector<8x256xf32>
    %46 = arith.addf %45, %44 : vector<8x256xf32>
    %47 = arith.divf %45, %46 : vector<8x256xf32>
    %48 = vector.extract_strided_slice %47 {offsets = [0, 0], sizes = [8, 64], strides = [1, 1]} : vector<8x256xf32> to vector<8x64xf32>
    %49 = vector.extract_strided_slice %47 {offsets = [0, 64], sizes = [8, 64], strides = [1, 1]} : vector<8x256xf32> to vector<8x64xf32>
    %50 = vector.extract_strided_slice %47 {offsets = [0, 128], sizes = [8, 64], strides = [1, 1]} : vector<8x256xf32> to vector<8x64xf32>
    %51 = vector.extract_strided_slice %47 {offsets = [0, 192], sizes = [8, 64], strides = [1, 1]} : vector<8x256xf32> to vector<8x64xf32>
    %cst_17 = arith.constant 2.000000e+00 : f32
    %52 = vector.broadcast %cst_17 : f32 to vector<8x64xf32>
    %53 = arith.mulf %52, %51 : vector<8x64xf32>
    %cst_18 = arith.constant 1.000000e+00 : f32
    %54 = vector.broadcast %cst_18 : f32 to vector<8x64xf32>
    %55 = arith.subf %53, %54 : vector<8x64xf32>
    %56 = arith.mulf %49, %36 : vector<8x64xf32>
    %57 = arith.mulf %48, %55 : vector<8x64xf32>
    %58 = arith.addf %56, %57 : vector<8x64xf32>
    %59 = math.tanh %58 : vector<8x64xf32>
    %60 = arith.mulf %50, %59 : vector<8x64xf32>
    %61 = vector.extract_strided_slice %13 {offsets = [16, 0], sizes = [8, 256], strides = [1, 1]} : vector<64x256xf32> to vector<8x256xf32>
    %62 = arith.truncf %60 : vector<8x64xf32> to vector<8x64xbf16>
    %cst_19 = arith.constant dense<0.000000e+00> : vector<8x256xf32>
    %63 = tpu.matmul %62, %14, %cst_19 {dimension_numbers = #tpu.dot_dimension_numbers<[1], [0], [0], [1], [0, 0, 1, 1], [], []>} : vector<8x64xbf16>, vector<64x256xbf16>, vector<8x256xf32> -> vector<8x256xf32>
    %64 = arith.addf %61, %63 : vector<8x256xf32>
    %65 = arith.negf %64 : vector<8x256xf32>
    %66 = math.exp %65 : vector<8x256xf32>
    %cst_20 = arith.constant 1.000000e+00 : f32
    %67 = vector.broadcast %cst_20 : f32 to vector<8x256xf32>
    %68 = arith.addf %67, %66 : vector<8x256xf32>
    %69 = arith.divf %67, %68 : vector<8x256xf32>
    %70 = vector.extract_strided_slice %69 {offsets = [0, 0], sizes = [8, 64], strides = [1, 1]} : vector<8x256xf32> to vector<8x64xf32>
    %71 = vector.extract_strided_slice %69 {offsets = [0, 64], sizes = [8, 64], strides = [1, 1]} : vector<8x256xf32> to vector<8x64xf32>
    %72 = vector.extract_strided_slice %69 {offsets = [0, 128], sizes = [8, 64], strides = [1, 1]} : vector<8x256xf32> to vector<8x64xf32>
    %73 = vector.extract_strided_slice %69 {offsets = [0, 192], sizes = [8, 64], strides = [1, 1]} : vector<8x256xf32> to vector<8x64xf32>
    %cst_21 = arith.constant 2.000000e+00 : f32
    %74 = vector.broadcast %cst_21 : f32 to vector<8x64xf32>
    %75 = arith.mulf %74, %73 : vector<8x64xf32>
    %cst_22 = arith.constant 1.000000e+00 : f32
    %76 = vector.broadcast %cst_22 : f32 to vector<8x64xf32>
    %77 = arith.subf %75, %76 : vector<8x64xf32>
    %78 = arith.mulf %71, %58 : vector<8x64xf32>
    %79 = arith.mulf %70, %77 : vector<8x64xf32>
    %80 = arith.addf %78, %79 : vector<8x64xf32>
    %81 = math.tanh %80 : vector<8x64xf32>
    %82 = arith.mulf %72, %81 : vector<8x64xf32>
    %83 = vector.extract_strided_slice %13 {offsets = [24, 0], sizes = [8, 256], strides = [1, 1]} : vector<64x256xf32> to vector<8x256xf32>
    %84 = arith.truncf %82 : vector<8x64xf32> to vector<8x64xbf16>
    %cst_23 = arith.constant dense<0.000000e+00> : vector<8x256xf32>
    %85 = tpu.matmul %84, %14, %cst_23 {dimension_numbers = #tpu.dot_dimension_numbers<[1], [0], [0], [1], [0, 0, 1, 1], [], []>} : vector<8x64xbf16>, vector<64x256xbf16>, vector<8x256xf32> -> vector<8x256xf32>
    %86 = arith.addf %83, %85 : vector<8x256xf32>
    %87 = arith.negf %86 : vector<8x256xf32>
    %88 = math.exp %87 : vector<8x256xf32>
    %cst_24 = arith.constant 1.000000e+00 : f32
    %89 = vector.broadcast %cst_24 : f32 to vector<8x256xf32>
    %90 = arith.addf %89, %88 : vector<8x256xf32>
    %91 = arith.divf %89, %90 : vector<8x256xf32>
    %92 = vector.extract_strided_slice %91 {offsets = [0, 0], sizes = [8, 64], strides = [1, 1]} : vector<8x256xf32> to vector<8x64xf32>
    %93 = vector.extract_strided_slice %91 {offsets = [0, 64], sizes = [8, 64], strides = [1, 1]} : vector<8x256xf32> to vector<8x64xf32>
    %94 = vector.extract_strided_slice %91 {offsets = [0, 128], sizes = [8, 64], strides = [1, 1]} : vector<8x256xf32> to vector<8x64xf32>
    %95 = vector.extract_strided_slice %91 {offsets = [0, 192], sizes = [8, 64], strides = [1, 1]} : vector<8x256xf32> to vector<8x64xf32>
    %cst_25 = arith.constant 2.000000e+00 : f32
    %96 = vector.broadcast %cst_25 : f32 to vector<8x64xf32>
    %97 = arith.mulf %96, %95 : vector<8x64xf32>
    %cst_26 = arith.constant 1.000000e+00 : f32
    %98 = vector.broadcast %cst_26 : f32 to vector<8x64xf32>
    %99 = arith.subf %97, %98 : vector<8x64xf32>
    %100 = arith.mulf %93, %80 : vector<8x64xf32>
    %101 = arith.mulf %92, %99 : vector<8x64xf32>
    %102 = arith.addf %100, %101 : vector<8x64xf32>
    %103 = math.tanh %102 : vector<8x64xf32>
    %104 = arith.mulf %94, %103 : vector<8x64xf32>
    %105 = vector.extract_strided_slice %13 {offsets = [32, 0], sizes = [8, 256], strides = [1, 1]} : vector<64x256xf32> to vector<8x256xf32>
    %106 = arith.truncf %104 : vector<8x64xf32> to vector<8x64xbf16>
    %cst_27 = arith.constant dense<0.000000e+00> : vector<8x256xf32>
    %107 = tpu.matmul %106, %14, %cst_27 {dimension_numbers = #tpu.dot_dimension_numbers<[1], [0], [0], [1], [0, 0, 1, 1], [], []>} : vector<8x64xbf16>, vector<64x256xbf16>, vector<8x256xf32> -> vector<8x256xf32>
    %108 = arith.addf %105, %107 : vector<8x256xf32>
    %109 = arith.negf %108 : vector<8x256xf32>
    %110 = math.exp %109 : vector<8x256xf32>
    %cst_28 = arith.constant 1.000000e+00 : f32
    %111 = vector.broadcast %cst_28 : f32 to vector<8x256xf32>
    %112 = arith.addf %111, %110 : vector<8x256xf32>
    %113 = arith.divf %111, %112 : vector<8x256xf32>
    %114 = vector.extract_strided_slice %113 {offsets = [0, 0], sizes = [8, 64], strides = [1, 1]} : vector<8x256xf32> to vector<8x64xf32>
    %115 = vector.extract_strided_slice %113 {offsets = [0, 64], sizes = [8, 64], strides = [1, 1]} : vector<8x256xf32> to vector<8x64xf32>
    %116 = vector.extract_strided_slice %113 {offsets = [0, 128], sizes = [8, 64], strides = [1, 1]} : vector<8x256xf32> to vector<8x64xf32>
    %117 = vector.extract_strided_slice %113 {offsets = [0, 192], sizes = [8, 64], strides = [1, 1]} : vector<8x256xf32> to vector<8x64xf32>
    %cst_29 = arith.constant 2.000000e+00 : f32
    %118 = vector.broadcast %cst_29 : f32 to vector<8x64xf32>
    %119 = arith.mulf %118, %117 : vector<8x64xf32>
    %cst_30 = arith.constant 1.000000e+00 : f32
    %120 = vector.broadcast %cst_30 : f32 to vector<8x64xf32>
    %121 = arith.subf %119, %120 : vector<8x64xf32>
    %122 = arith.mulf %115, %102 : vector<8x64xf32>
    %123 = arith.mulf %114, %121 : vector<8x64xf32>
    %124 = arith.addf %122, %123 : vector<8x64xf32>
    %125 = math.tanh %124 : vector<8x64xf32>
    %126 = arith.mulf %116, %125 : vector<8x64xf32>
    %127 = vector.extract_strided_slice %13 {offsets = [40, 0], sizes = [8, 256], strides = [1, 1]} : vector<64x256xf32> to vector<8x256xf32>
    %128 = arith.truncf %126 : vector<8x64xf32> to vector<8x64xbf16>
    %cst_31 = arith.constant dense<0.000000e+00> : vector<8x256xf32>
    %129 = tpu.matmul %128, %14, %cst_31 {dimension_numbers = #tpu.dot_dimension_numbers<[1], [0], [0], [1], [0, 0, 1, 1], [], []>} : vector<8x64xbf16>, vector<64x256xbf16>, vector<8x256xf32> -> vector<8x256xf32>
    %130 = arith.addf %127, %129 : vector<8x256xf32>
    %131 = arith.negf %130 : vector<8x256xf32>
    %132 = math.exp %131 : vector<8x256xf32>
    %cst_32 = arith.constant 1.000000e+00 : f32
    %133 = vector.broadcast %cst_32 : f32 to vector<8x256xf32>
    %134 = arith.addf %133, %132 : vector<8x256xf32>
    %135 = arith.divf %133, %134 : vector<8x256xf32>
    %136 = vector.extract_strided_slice %135 {offsets = [0, 0], sizes = [8, 64], strides = [1, 1]} : vector<8x256xf32> to vector<8x64xf32>
    %137 = vector.extract_strided_slice %135 {offsets = [0, 64], sizes = [8, 64], strides = [1, 1]} : vector<8x256xf32> to vector<8x64xf32>
    %138 = vector.extract_strided_slice %135 {offsets = [0, 128], sizes = [8, 64], strides = [1, 1]} : vector<8x256xf32> to vector<8x64xf32>
    %139 = vector.extract_strided_slice %135 {offsets = [0, 192], sizes = [8, 64], strides = [1, 1]} : vector<8x256xf32> to vector<8x64xf32>
    %cst_33 = arith.constant 2.000000e+00 : f32
    %140 = vector.broadcast %cst_33 : f32 to vector<8x64xf32>
    %141 = arith.mulf %140, %139 : vector<8x64xf32>
    %cst_34 = arith.constant 1.000000e+00 : f32
    %142 = vector.broadcast %cst_34 : f32 to vector<8x64xf32>
    %143 = arith.subf %141, %142 : vector<8x64xf32>
    %144 = arith.mulf %137, %124 : vector<8x64xf32>
    %145 = arith.mulf %136, %143 : vector<8x64xf32>
    %146 = arith.addf %144, %145 : vector<8x64xf32>
    %147 = math.tanh %146 : vector<8x64xf32>
    %148 = arith.mulf %138, %147 : vector<8x64xf32>
    %149 = vector.extract_strided_slice %13 {offsets = [48, 0], sizes = [8, 256], strides = [1, 1]} : vector<64x256xf32> to vector<8x256xf32>
    %150 = arith.truncf %148 : vector<8x64xf32> to vector<8x64xbf16>
    %cst_35 = arith.constant dense<0.000000e+00> : vector<8x256xf32>
    %151 = tpu.matmul %150, %14, %cst_35 {dimension_numbers = #tpu.dot_dimension_numbers<[1], [0], [0], [1], [0, 0, 1, 1], [], []>} : vector<8x64xbf16>, vector<64x256xbf16>, vector<8x256xf32> -> vector<8x256xf32>
    %152 = arith.addf %149, %151 : vector<8x256xf32>
    %153 = arith.negf %152 : vector<8x256xf32>
    %154 = math.exp %153 : vector<8x256xf32>
    %cst_36 = arith.constant 1.000000e+00 : f32
    %155 = vector.broadcast %cst_36 : f32 to vector<8x256xf32>
    %156 = arith.addf %155, %154 : vector<8x256xf32>
    %157 = arith.divf %155, %156 : vector<8x256xf32>
    %158 = vector.extract_strided_slice %157 {offsets = [0, 0], sizes = [8, 64], strides = [1, 1]} : vector<8x256xf32> to vector<8x64xf32>
    %159 = vector.extract_strided_slice %157 {offsets = [0, 64], sizes = [8, 64], strides = [1, 1]} : vector<8x256xf32> to vector<8x64xf32>
    %160 = vector.extract_strided_slice %157 {offsets = [0, 128], sizes = [8, 64], strides = [1, 1]} : vector<8x256xf32> to vector<8x64xf32>
    %161 = vector.extract_strided_slice %157 {offsets = [0, 192], sizes = [8, 64], strides = [1, 1]} : vector<8x256xf32> to vector<8x64xf32>
    %cst_37 = arith.constant 2.000000e+00 : f32
    %162 = vector.broadcast %cst_37 : f32 to vector<8x64xf32>
    %163 = arith.mulf %162, %161 : vector<8x64xf32>
    %cst_38 = arith.constant 1.000000e+00 : f32
    %164 = vector.broadcast %cst_38 : f32 to vector<8x64xf32>
    %165 = arith.subf %163, %164 : vector<8x64xf32>
    %166 = arith.mulf %159, %146 : vector<8x64xf32>
    %167 = arith.mulf %158, %165 : vector<8x64xf32>
    %168 = arith.addf %166, %167 : vector<8x64xf32>
    %169 = math.tanh %168 : vector<8x64xf32>
    %170 = arith.mulf %160, %169 : vector<8x64xf32>
    %171 = vector.extract_strided_slice %13 {offsets = [56, 0], sizes = [8, 256], strides = [1, 1]} : vector<64x256xf32> to vector<8x256xf32>
    %172 = arith.truncf %170 : vector<8x64xf32> to vector<8x64xbf16>
    %cst_39 = arith.constant dense<0.000000e+00> : vector<8x256xf32>
    %173 = tpu.matmul %172, %14, %cst_39 {dimension_numbers = #tpu.dot_dimension_numbers<[1], [0], [0], [1], [0, 0, 1, 1], [], []>} : vector<8x64xbf16>, vector<64x256xbf16>, vector<8x256xf32> -> vector<8x256xf32>
    %174 = arith.addf %171, %173 : vector<8x256xf32>
    %175 = arith.negf %174 : vector<8x256xf32>
    %176 = math.exp %175 : vector<8x256xf32>
    %cst_40 = arith.constant 1.000000e+00 : f32
    %177 = vector.broadcast %cst_40 : f32 to vector<8x256xf32>
    %178 = arith.addf %177, %176 : vector<8x256xf32>
    %179 = arith.divf %177, %178 : vector<8x256xf32>
    %180 = vector.extract_strided_slice %179 {offsets = [0, 0], sizes = [8, 64], strides = [1, 1]} : vector<8x256xf32> to vector<8x64xf32>
    %181 = vector.extract_strided_slice %179 {offsets = [0, 64], sizes = [8, 64], strides = [1, 1]} : vector<8x256xf32> to vector<8x64xf32>
    %182 = vector.extract_strided_slice %179 {offsets = [0, 128], sizes = [8, 64], strides = [1, 1]} : vector<8x256xf32> to vector<8x64xf32>
    %183 = vector.extract_strided_slice %179 {offsets = [0, 192], sizes = [8, 64], strides = [1, 1]} : vector<8x256xf32> to vector<8x64xf32>
    %cst_41 = arith.constant 2.000000e+00 : f32
    %184 = vector.broadcast %cst_41 : f32 to vector<8x64xf32>
    %185 = arith.mulf %184, %183 : vector<8x64xf32>
    %cst_42 = arith.constant 1.000000e+00 : f32
    %186 = vector.broadcast %cst_42 : f32 to vector<8x64xf32>
    %187 = arith.subf %185, %186 : vector<8x64xf32>
    %188 = arith.mulf %181, %168 : vector<8x64xf32>
    %189 = arith.mulf %180, %187 : vector<8x64xf32>
    %190 = arith.addf %188, %189 : vector<8x64xf32>
    %191 = math.tanh %190 : vector<8x64xf32>
    %192 = arith.mulf %182, %191 : vector<8x64xf32>
    %193 = arith.truncf %192 : vector<8x64xf32> to vector<8x64xbf16>
    %c0_43 = arith.constant 0 : index
    %c0_44 = arith.constant 0 : index
    %194 = vector.load %arg4[%c0_43, %c0_44] : memref<64x128xbf16, #tpu.memory_space<vmem>>, vector<64x128xbf16>
    %cst_45 = arith.constant dense<0.000000e+00> : vector<8x128xf32>
    %195 = tpu.matmul %193, %194, %cst_45 {dimension_numbers = #tpu.dot_dimension_numbers<[1], [0], [0], [1], [0, 0, 1, 1], [], []>} : vector<8x64xbf16>, vector<64x128xbf16>, vector<8x128xf32> -> vector<8x128xf32>
    %c0_46 = arith.constant 0 : index
    %c0_47 = arith.constant 0 : index
    %196 = vector.load %arg5[%c0_46, %c0_47] : memref<1x128xf32, #tpu.memory_space<vmem>>, vector<1x128xf32>
    %197 = vector.broadcast %196 : vector<1x128xf32> to vector<8x128xf32>
    %198 = arith.addf %195, %197 : vector<8x128xf32>
    %c0_48 = arith.constant 0 : index
    %c0_49 = arith.constant 0 : index
    %199 = vector.load %arg6[%c0_48, %c0_49] : memref<8x128xf32, #tpu.memory_space<vmem>>, vector<8x128xf32>
    tpu.vector_store %arg6[%c0_48, %c0_49], %198 {strides = array<i32>} : memref<8x128xf32, #tpu.memory_space<vmem>>, vector<8x128xf32>,
    return
  }
}

</mosaic_0001>

<llo_original>
// kernel: bilstm_forward.1
$region0: #{bilstm_forward.1}
  #allocation0 [shape = 'u32[]', space=smem, size = 0x4, offset = 0x4, fixed_abs, tag = 'smem constant byte address 0x4 - core index']
  #allocation1 [shape = 'u32[72,128]{1,0:T(1,128)}', space=vmem, size = 0x9000, scoped, tag = 'internal scratch']
  %s0 = inlined_call_operand.vmem [shape: s32[64,1], index: 0, kind: input, shape index: {}]
  %s1 = inlined_call_operand.vmem [shape: s32[64,1], index: 1, kind: input, shape index: {}]
  %s2 = inlined_call_operand.vmem [shape: bf16[128,256], index: 2, kind: input, shape index: {}]
  %s3 = inlined_call_operand.vmem [shape: bf16[64,256], index: 3, kind: input, shape index: {}]
  %s4 = inlined_call_operand.vmem [shape: bf16[64,128], index: 4, kind: input, shape index: {}]
  %s5 = inlined_call_operand.vmem [shape: f32[1,128], index: 5, kind: input, shape index: {}]
  %s6 = inlined_call_operand.vmem [shape: f32[8,128], index: 6, kind: output, shape index: {}]
  %s7 = sld [smem:[#allocation0]]
  $region34: #{bilstm_forward.1} parent=0
    _
  %s9 = ssub.s32 1, %s7
  %s10 = scalar_select 0, %s9, %s7
  // Predicated region
  $region2: #{bilstm_forward.1} parent=0 // pred_check
    _
  $region3: #{bilstm_forward.1} parent=0 // pred_check_branch
    %12 = sbr.rel (0) target = $region5
  $region4: #{bilstm_forward.1} parent=0 // pred_region
    _
  $region5: #{bilstm_forward.1} parent=0 // pred_fallthru
    _
  // Predicated region
  $region6: #{bilstm_forward.1} parent=0 // pred_check
    _
  $region7: #{bilstm_forward.1} parent=0 // pred_check_branch
    %14 = sbr.rel (0) target = $region9
  $region8: #{bilstm_forward.1} parent=0 // pred_region
    _
  $region9: #{bilstm_forward.1} parent=0 // pred_fallthru
    _
  // Predicated region
  $region10: #{bilstm_forward.1} parent=0 // pred_check
    _
  $region11: #{bilstm_forward.1} parent=0 // pred_check_branch
    %16 = sbr.rel (0) target = $region13
  $region12: #{bilstm_forward.1} parent=0 // pred_region
    _
  $region13: #{bilstm_forward.1} parent=0 // pred_fallthru
    _
  // Predicated region
  $region14: #{bilstm_forward.1} parent=0 // pred_check
    _
  $region15: #{bilstm_forward.1} parent=0 // pred_check_branch
    %18 = sbr.rel (0) target = $region17
  $region16: #{bilstm_forward.1} parent=0 // pred_region
    _
  $region17: #{bilstm_forward.1} parent=0 // pred_fallthru
    _
  // Predicated region
  $region18: #{bilstm_forward.1} parent=0 // pred_check
    _
  $region19: #{bilstm_forward.1} parent=0 // pred_check_branch
    %20 = sbr.rel (0) target = $region21
  $region20: #{bilstm_forward.1} parent=0 // pred_region
    _
  $region21: #{bilstm_forward.1} parent=0 // pred_fallthru
    _
  // Predicated region
  $region22: #{bilstm_forward.1} parent=0 // pred_check
    _
  $region23: #{bilstm_forward.1} parent=0 // pred_check_branch
    %22 = sbr.rel (0) target = $region25
  $region24: #{bilstm_forward.1} parent=0 // pred_region
    _
  $region25: #{bilstm_forward.1} parent=0 // pred_fallthru
    _
  %v24 = vlaneseq
  %v25 = vand.u32 %v24, 127
  %v26 = vld [vmem:[%s0] sm:$0xff]
  %v27 = vld [vmem:[%s0 + $0x8] sm:$0xff]
  %v28 = vld [vmem:[%s0 + $0x10] sm:$0xff]
  %v29 = vld [vmem:[%s0 + $0x18] sm:$0xff]
  %v30 = vld [vmem:[%s0 + $0x20] sm:$0xff]
  %v31 = vld [vmem:[%s0 + $0x28] sm:$0xff]
  %v32 = vld [vmem:[%s0 + $0x30] sm:$0xff]
  %v33 = vld [vmem:[%s0 + $0x38] sm:$0xff]
  %34 = vset.pattern.permute.xlu0 0
  %35 = vperm.xlu0 %34, %v26
  %v36 = vpop.permute.xlu0 %35
  %37 = vset.pattern.permute.xlu0 0
  %38 = vperm.xlu0 %37, %v27
  %v39 = vpop.permute.xlu0 %38
  %40 = vset.pattern.permute.xlu0 0
  %41 = vperm.xlu0 %40, %v28
  %v42 = vpop.permute.xlu0 %41
  %43 = vset.pattern.permute.xlu0 0
  %44 = vperm.xlu0 %43, %v29
  %v45 = vpop.permute.xlu0 %44
  %46 = vset.pattern.permute.xlu0 0
  %47 = vperm.xlu0 %46, %v30
  %v48 = vpop.permute.xlu0 %47
  %49 = vset.pattern.permute.xlu0 0
  %50 = vperm.xlu0 %49, %v31
  %v51 = vpop.permute.xlu0 %50
  %52 = vset.pattern.permute.xlu0 0
  %53 = vperm.xlu0 %52, %v32
  %v54 = vpop.permute.xlu0 %53
  %55 = vset.pattern.permute.xlu0 0
  %56 = vperm.xlu0 %55, %v33
  %v57 = vpop.permute.xlu0 %56
  %vm58 = vcmp.eq.s32.totalorder %v25, %v36
  %vm59 = vcmp.eq.s32.totalorder %v25, %v39
  %vm60 = vcmp.eq.s32.totalorder %v25, %v42
  %vm61 = vcmp.eq.s32.totalorder %v25, %v45
  %vm62 = vcmp.eq.s32.totalorder %v25, %v48
  %vm63 = vcmp.eq.s32.totalorder %v25, %v51
  %vm64 = vcmp.eq.s32.totalorder %v25, %v54
  %vm65 = vcmp.eq.s32.totalorder %v25, %v57
  %v66 = vld [vmem:[%s1] sm:$0xff]
  %v67 = vld [vmem:[%s1 + $0x8] sm:$0xff]
  %v68 = vld [vmem:[%s1 + $0x10] sm:$0xff]
  %v69 = vld [vmem:[%s1 + $0x18] sm:$0xff]
  %v70 = vld [vmem:[%s1 + $0x20] sm:$0xff]
  %v71 = vld [vmem:[%s1 + $0x28] sm:$0xff]
  %v72 = vld [vmem:[%s1 + $0x30] sm:$0xff]
  %v73 = vld [vmem:[%s1 + $0x38] sm:$0xff]
  %74 = vset.pattern.permute.xlu0 0
  %75 = vperm.xlu0 %74, %v66
  %v76 = vpop.permute.xlu0 %75
  %77 = vset.pattern.permute.xlu0 0
  %78 = vperm.xlu0 %77, %v67
  %v79 = vpop.permute.xlu0 %78
  %80 = vset.pattern.permute.xlu0 0
  %81 = vperm.xlu0 %80, %v68
  %v82 = vpop.permute.xlu0 %81
  %83 = vset.pattern.permute.xlu0 0
  %84 = vperm.xlu0 %83, %v69
  %v85 = vpop.permute.xlu0 %84
  %86 = vset.pattern.permute.xlu0 0
  %87 = vperm.xlu0 %86, %v70
  %v88 = vpop.permute.xlu0 %87
  %89 = vset.pattern.permute.xlu0 0
  %90 = vperm.xlu0 %89, %v71
  %v91 = vpop.permute.xlu0 %90
  %92 = vset.pattern.permute.xlu0 0
  %93 = vperm.xlu0 %92, %v72
  %v94 = vpop.permute.xlu0 %93
  %95 = vset.pattern.permute.xlu0 0
  %96 = vperm.xlu0 %95, %v73
  %v97 = vpop.permute.xlu0 %96
  %vm98 = vcmp.eq.s32.totalorder %v25, %v76
  %vm99 = vcmp.eq.s32.totalorder %v25, %v79
  %vm100 = vcmp.eq.s32.totalorder %v25, %v82
  %vm101 = vcmp.eq.s32.totalorder %v25, %v85
  %vm102 = vcmp.eq.s32.totalorder %v25, %v88
  %vm103 = vcmp.eq.s32.totalorder %v25, %v91
  %vm104 = vcmp.eq.s32.totalorder %v25, %v94
  %vm105 = vcmp.eq.s32.totalorder %v25, %v97
  %vm106 = vmor %vm58, %vm98
  %vm107 = vmor %vm59, %vm99
  %vm108 = vmor %vm60, %vm100
  %vm109 = vmor %vm61, %vm101
  %vm110 = vmor %vm62, %vm102
  %vm111 = vmor %vm63, %vm103
  %vm112 = vmor %vm64, %vm104
  %vm113 = vmor %vm65, %vm105
  %v114 = vsel %vm106, 1.0, 0.0
  %v115 = vsel %vm107, 1.0, 0.0
  %v116 = vsel %vm108, 1.0, 0.0
  %v117 = vsel %vm109, 1.0, 0.0
  %v118 = vsel %vm110, 1.0, 0.0
  %v119 = vsel %vm111, 1.0, 0.0
  %v120 = vsel %vm112, 1.0, 0.0
  %v121 = vsel %vm113, 1.0, 0.0
  %v122 = vpack.c.bf16 %v115, %v114
  %v123 = vpack.c.bf16 %v117, %v116
  %v124 = vpack.c.bf16 %v119, %v118
  %v125 = vpack.c.bf16 %v121, %v120
  %v126 = vld [vmem:[%s2] sm:$0xff]
  %v127 = vld [vmem:[%s2 + $0x8] sm:$0xff]
  %v128 = vld [vmem:[%s2 + $0x10] sm:$0xff]
  %v129 = vld [vmem:[%s2 + $0x18] sm:$0xff]
  %v130 = vld [vmem:[%s2 + $0x20] sm:$0xff]
  %v131 = vld [vmem:[%s2 + $0x28] sm:$0xff]
  %v132 = vld [vmem:[%s2 + $0x30] sm:$0xff]
  %v133 = vld [vmem:[%s2 + $0x38] sm:$0xff]
  %v134 = vld [vmem:[%s2 + $0x40] sm:$0xff]
  %v135 = vld [vmem:[%s2 + $0x48] sm:$0xff]
  %v136 = vld [vmem:[%s2 + $0x50] sm:$0xff]
  %v137 = vld [vmem:[%s2 + $0x58] sm:$0xff]
  %v138 = vld [vmem:[%s2 + $0x60] sm:$0xff]
  %v139 = vld [vmem:[%s2 + $0x68] sm:$0xff]
  %v140 = vld [vmem:[%s2 + $0x70] sm:$0xff]
  %v141 = vld [vmem:[%s2 + $0x78] sm:$0xff]
  %v158 = vunpack.c.l.b16 %v126
  %v159 = vunpack.c.h.b16 %v126
  %v160 = vunpack.c.l.b16 %v127
  %v161 = vunpack.c.h.b16 %v127
  %v162 = vunpack.c.l.b16 %v128
  %v163 = vunpack.c.h.b16 %v128
  %v164 = vunpack.c.l.b16 %v129
  %v165 = vunpack.c.h.b16 %v129
  %v166 = vunpack.c.l.b16 %v130
  %v167 = vunpack.c.h.b16 %v130
  %v168 = vunpack.c.l.b16 %v131
  %v169 = vunpack.c.h.b16 %v131
  %v170 = vunpack.c.l.b16 %v132
  %v171 = vunpack.c.h.b16 %v132
  %v172 = vunpack.c.l.b16 %v133
  %v173 = vunpack.c.h.b16 %v133
  %v174 = vunpack.c.l.b16 %v134
  %v175 = vunpack.c.h.b16 %v134
  %v176 = vunpack.c.l.b16 %v135
  %v177 = vunpack.c.h.b16 %v135
  %v178 = vunpack.c.l.b16 %v136
  %v179 = vunpack.c.h.b16 %v136
  %v180 = vunpack.c.l.b16 %v137
  %v181 = vunpack.c.h.b16 %v137
  %v182 = vunpack.c.l.b16 %v138
  %v183 = vunpack.c.h.b16 %v138
  %v184 = vunpack.c.l.b16 %v139
  %v185 = vunpack.c.h.b16 %v139
  %v186 = vunpack.c.l.b16 %v140
  %v187 = vunpack.c.h.b16 %v140
  %v188 = vunpack.c.l.b16 %v141
  %v189 = vunpack.c.h.b16 %v141
  %v190 = vpack.c.b16 %v160, %v158
  %v191 = vpack.c.b16 %v161, %v159
  %v192 = vpack.c.b16 %v164, %v162
  %v193 = vpack.c.b16 %v165, %v163
  %v194 = vpack.c.b16 %v168, %v166
  %v195 = vpack.c.b16 %v169, %v167
  %v196 = vpack.c.b16 %v172, %v170
  %v197 = vpack.c.b16 %v173, %v171
  %v198 = vpack.c.b16 %v176, %v174
  %v199 = vpack.c.b16 %v177, %v175
  %v200 = vpack.c.b16 %v180, %v178
  %v201 = vpack.c.b16 %v181, %v179
  %v202 = vpack.c.b16 %v184, %v182
  %v203 = vpack.c.b16 %v185, %v183
  %v204 = vpack.c.b16 %v188, %v186
  %v205 = vpack.c.b16 %v189, %v187
  %222 = vmatpush.bf16.msra.mxu0 %v204
  %223 = vmatpush.bf16.msra.mxu0 %v202
  %224 = vmatpush.bf16.msra.mxu0 %v200
  %225 = vmatpush.bf16.msra.mxu0 %v198
  %226 = vmatpush.bf16.msra.mxu0 %v196
  %227 = vmatpush.bf16.msra.mxu0 %v194
  %228 = vmatpush.bf16.msra.mxu0 %v192
  %229 = vmatpush.bf16.msra.mxu0 %v190
  %230 = vmatmul.bf16.gmra.mxu0 %v122
  %v231 = vpop.f32.mrf.mxu0
  %v232 = vadd.f32 0.0, %v231
  %v233 = vpop.f32.mrf.mxu0
  %v234 = vadd.f32 0.0, %v233
  %235 = vmatmul.bf16.gmra.mxu0 %v123
  %v236 = vpop.f32.mrf.mxu0
  %v237 = vadd.f32 0.0, %v236
  %v238 = vpop.f32.mrf.mxu0
  %v239 = vadd.f32 0.0, %v238
  %240 = vmatmul.bf16.gmra.mxu0 %v124
  %v241 = vpop.f32.mrf.mxu0
  %v242 = vadd.f32 0.0, %v241
  %v243 = vpop.f32.mrf.mxu0
  %v244 = vadd.f32 0.0, %v243
  %245 = vmatmul.bf16.gmra.mxu0 %v125
  %v246 = vpop.f32.mrf.mxu0
  %v247 = vadd.f32 0.0, %v246
  %v248 = vpop.f32.mrf.mxu0
  %v249 = vadd.f32 0.0, %v248
  %250 = vdwg.mxu0
  %251 = vmatpush.bf16.msra.mxu0 %v205
  %252 = vmatpush.bf16.msra.mxu0 %v203
  %253 = vmatpush.bf16.msra.mxu0 %v201
  %254 = vmatpush.bf16.msra.mxu0 %v199
  %255 = vmatpush.bf16.msra.mxu0 %v197
  %256 = vmatpush.bf16.msra.mxu0 %v195
  %257 = vmatpush.bf16.msra.mxu0 %v193
  %258 = vmatpush.bf16.msra.mxu0 %v191
  %259 = vmatmul.bf16.gmra.mxu0 %v122
  %v260 = vpop.f32.mrf.mxu0
  %v261 = vadd.f32 0.0, %v260
  %v262 = vpop.f32.mrf.mxu0
  %v263 = vadd.f32 0.0, %v262
  %264 = vmatmul.bf16.gmra.mxu0 %v123
  %v265 = vpop.f32.mrf.mxu0
  %v266 = vadd.f32 0.0, %v265
  %v267 = vpop.f32.mrf.mxu0
  %v268 = vadd.f32 0.0, %v267
  %269 = vmatmul.bf16.gmra.mxu0 %v124
  %v270 = vpop.f32.mrf.mxu0
  %v271 = vadd.f32 0.0, %v270
  %v272 = vpop.f32.mrf.mxu0
  %v273 = vadd.f32 0.0, %v272
  %274 = vmatmul.bf16.gmra.mxu0 %v125
  %v275 = vpop.f32.mrf.mxu0
  %v276 = vadd.f32 0.0, %v275
  %v277 = vpop.f32.mrf.mxu0
  %v278 = vadd.f32 0.0, %v277
  %279 = vdwg.mxu0
  %v280 = vld [vmem:[%s3] sm:$0xff]
  %v281 = vld [vmem:[%s3 + $0x8] sm:$0xff]
  %v282 = vld [vmem:[%s3 + $0x10] sm:$0xff]
  %v283 = vld [vmem:[%s3 + $0x18] sm:$0xff]
  %v284 = vld [vmem:[%s3 + $0x20] sm:$0xff]
  %v285 = vld [vmem:[%s3 + $0x28] sm:$0xff]
  %v286 = vld [vmem:[%s3 + $0x30] sm:$0xff]
  %v287 = vld [vmem:[%s3 + $0x38] sm:$0xff]
  %v296 = vunpack.c.l.b16 %v280
  %v297 = vunpack.c.h.b16 %v280
  %v298 = vunpack.c.l.b16 %v281
  %v299 = vunpack.c.h.b16 %v281
  %v300 = vunpack.c.l.b16 %v282
  %v301 = vunpack.c.h.b16 %v282
  %v302 = vunpack.c.l.b16 %v283
  %v303 = vunpack.c.h.b16 %v283
  %v304 = vunpack.c.l.b16 %v284
  %v305 = vunpack.c.h.b16 %v284
  %v306 = vunpack.c.l.b16 %v285
  %v307 = vunpack.c.h.b16 %v285
  %v308 = vunpack.c.l.b16 %v286
  %v309 = vunpack.c.h.b16 %v286
  %v310 = vunpack.c.l.b16 %v287
  %v311 = vunpack.c.h.b16 %v287
  %v312 = vpack.c.b16 %v298, %v296
  %v313 = vpack.c.b16 %v299, %v297
  %v314 = vpack.c.b16 %v302, %v300
  %v315 = vpack.c.b16 %v303, %v301
  %v316 = vpack.c.b16 %v306, %v304
  %v317 = vpack.c.b16 %v307, %v305
  %v318 = vpack.c.b16 %v310, %v308
  %v319 = vpack.c.b16 %v311, %v309
  %vm328 = vcmask 523264
  %v330 = vsel %vm328, 0, 0
  %332 = vmatpush.bf16.msra.mxu0 0
  %333 = vmatpush.bf16.msra.mxu0 0
  %334 = vmatpush.bf16.msra.mxu0 0
  %335 = vmatpush.bf16.msra.mxu0 0
  %336 = vmatpush.bf16.msra.mxu0 %v318
  %337 = vmatpush.bf16.msra.mxu0 %v316
  %338 = vmatpush.bf16.msra.mxu0 %v314
  %339 = vmatpush.bf16.msra.mxu0 %v312
  %340 = vmatmul.bf16.gmra.mxu0 %v330
  %v341 = vpop.f32.mrf.mxu0
  %v342 = vadd.f32 0.0, %v341
  %v343 = vpop.f32.mrf.mxu0
  %344 = vdwg.mxu0
  %345 = vmatpush.bf16.msra.mxu0 0
  %346 = vmatpush.bf16.msra.mxu0 0
  %347 = vmatpush.bf16.msra.mxu0 0
  %348 = vmatpush.bf16.msra.mxu0 0
  %349 = vmatpush.bf16.msra.mxu0 %v319
  %350 = vmatpush.bf16.msra.mxu0 %v317
  %351 = vmatpush.bf16.msra.mxu0 %v315
  %352 = vmatpush.bf16.msra.mxu0 %v313
  %353 = vmatmul.bf16.gmra.mxu0 %v330
  %v354 = vpop.f32.mrf.mxu0
  %v355 = vadd.f32 0.0, %v354
  %v356 = vpop.f32.mrf.mxu0
  %357 = vdwg.mxu0
  %v358 = vadd.f32 %v232, %v342
  %v359 = vadd.f32 %v261, %v355
  %v360 = vxor.u32 %v358, 2147483648
  %v361 = vxor.u32 %v359, 2147483648
  %v362 = vmul.f32 %v360, 1.442695
  %v363 = vpow.pop %v362
  %v364 = vmul.f32 %v361, 1.442695
  %v365 = vpow.pop %v364
  %v366 = vadd.f32 %v363, 1.0
  %v367 = vadd.f32 %v365, 1.0
  %v368 = vrcp.pop %v366
  %v369 = vmul.f32 %v366, %v368
  %v370 = vsub.f32 1.0, %v369
  %v371 = vmul.f32 %v368, %v370
  %v372 = vadd.f32 %v368, %v371
  %vm373 = vweird.f32 %v366
  %vm374 = vweird.f32 %v368
  %vm375 = vmor %vm373, %vm374
  %v376 = vsel %vm375, %v368, %v372
  %v377 = vand.u32 2147483647, %v366
  %vm378 = vcmp.eq.f32.partialorder %v377, 8.507059e+37
  %v379 = vand.u32 %v366, 2147483648
  %v380 = vor.u32 1.1754944e-38, %v379
  %v381 = vsel %vm378, %v380, %v376
  %v382 = vmul.f32 1.0, %v381
  %v383 = vrcp.pop %v367
  %v384 = vmul.f32 %v367, %v383
  %v385 = vsub.f32 1.0, %v384
  %v386 = vmul.f32 %v383, %v385
  %v387 = vadd.f32 %v383, %v386
  %vm388 = vweird.f32 %v367
  %vm389 = vweird.f32 %v383
  %vm390 = vmor %vm388, %vm389
  %v391 = vsel %vm390, %v383, %v387
  %v392 = vand.u32 2147483647, %v367
  %vm393 = vcmp.eq.f32.partialorder %v392, 8.507059e+37
  %v394 = vand.u32 %v367, 2147483648
  %v395 = vor.u32 1.1754944e-38, %v394
  %v396 = vsel %vm393, %v395, %v391
  %v397 = vmul.f32 1.0, %v396
  %v398 = vmul.f32 %v397, 2.0
  %v399 = vsub.f32 %v398, 1.0
  %v400 = vmul.f32 %v382, 0.0
  %402 = vrot.lane.b32.xlu0 %v399, 64
  %v403 = vpop.permute.xlu0 %402
  %v405 = vmul.f32 %v382, %v403
  %407 = vrot.lane.b32.xlu0 %v405, 64
  %v408 = vpop.permute.xlu0 %407
  %v410 = vadd.f32 %v400, %v408
  %v411 = vtanh.pop %v410
  %413 = vrot.lane.b32.xlu0 %v411, 64
  %v414 = vpop.permute.xlu0 %413
  %v416 = vmul.f32 %v397, %v414
  %v417 = vpack.c.bf16 %v416, %v416
  %v419 = vsel %vm328, %v417, 0
  %421 = vmatpush.bf16.msra.mxu0 0
  %422 = vmatpush.bf16.msra.mxu0 0
  %423 = vmatpush.bf16.msra.mxu0 0
  %424 = vmatpush.bf16.msra.mxu0 0
  %425 = vmatpush.bf16.msra.mxu0 %v318
  %426 = vmatpush.bf16.msra.mxu0 %v316
  %427 = vmatpush.bf16.msra.mxu0 %v314
  %428 = vmatpush.bf16.msra.mxu0 %v312
  %429 = vmatmul.bf16.gmra.mxu0 %v419
  %v430 = vpop.f32.mrf.mxu0
  %v431 = vadd.f32 0.0, %v430
  %v432 = vpop.f32.mrf.mxu0
  %433 = vdwg.mxu0
  %434 = vmatpush.bf16.msra.mxu0 0
  %435 = vmatpush.bf16.msra.mxu0 0
  %436 = vmatpush.bf16.msra.mxu0 0
  %437 = vmatpush.bf16.msra.mxu0 0
  %438 = vmatpush.bf16.msra.mxu0 %v319
  %439 = vmatpush.bf16.msra.mxu0 %v317
  %440 = vmatpush.bf16.msra.mxu0 %v315
  %441 = vmatpush.bf16.msra.mxu0 %v313
  %442 = vmatmul.bf16.gmra.mxu0 %v419
  %v443 = vpop.f32.mrf.mxu0
  %v444 = vadd.f32 0.0, %v443
  %v445 = vpop.f32.mrf.mxu0
  %446 = vdwg.mxu0
  %v447 = vadd.f32 %v234, %v431
  %v448 = vadd.f32 %v263, %v444
  %v449 = vxor.u32 %v447, 2147483648
  %v450 = vxor.u32 %v448, 2147483648
  %v451 = vmul.f32 %v449, 1.442695
  %v452 = vpow.pop %v451
  %v453 = vmul.f32 %v450, 1.442695
  %v454 = vpow.pop %v453
  %v455 = vadd.f32 %v452, 1.0
  %v456 = vadd.f32 %v454, 1.0
  %v457 = vrcp.pop %v455
  %v458 = vmul.f32 %v455, %v457
  %v459 = vsub.f32 1.0, %v458
  %v460 = vmul.f32 %v457, %v459
  %v461 = vadd.f32 %v457, %v460
  %vm462 = vweird.f32 %v455
  %vm463 = vweird.f32 %v457
  %vm464 = vmor %vm462, %vm463
  %v465 = vsel %vm464, %v457, %v461
  %v466 = vand.u32 2147483647, %v455
  %vm467 = vcmp.eq.f32.partialorder %v466, 8.507059e+37
  %v468 = vand.u32 %v455, 2147483648
  %v469 = vor.u32 1.1754944e-38, %v468
  %v470 = vsel %vm467, %v469, %v465
  %v471 = vmul.f32 1.0, %v470
  %v472 = vrcp.pop %v456
  %v473 = vmul.f32 %v456, %v472
  %v474 = vsub.f32 1.0, %v473
  %v475 = vmul.f32 %v472, %v474
  %v476 = vadd.f32 %v472, %v475
  %vm477 = vweird.f32 %v456
  %vm478 = vweird.f32 %v472
  %vm479 = vmor %vm477, %vm478
  %v480 = vsel %vm479, %v472, %v476
  %v481 = vand.u32 2147483647, %v456
  %vm482 = vcmp.eq.f32.partialorder %v481, 8.507059e+37
  %v483 = vand.u32 %v456, 2147483648
  %v484 = vor.u32 1.1754944e-38, %v483
  %v485 = vsel %vm482, %v484, %v480
  %v486 = vmul.f32 1.0, %v485
  %v487 = vmul.f32 %v486, 2.0
  %v488 = vsub.f32 %v487, 1.0
  %v489 = vmul.f32 %v471, %v410
  %491 = vrot.lane.b32.xlu0 %v488, 64
  %v492 = vpop.permute.xlu0 %491
  %v494 = vmul.f32 %v471, %v492
  %496 = vrot.lane.b32.xlu0 %v494, 64
  %v497 = vpop.permute.xlu0 %496
  %v499 = vadd.f32 %v489, %v497
  %v500 = vtanh.pop %v499
  %502 = vrot.lane.b32.xlu0 %v500, 64
  %v503 = vpop.permute.xlu0 %502
  %v505 = vmul.f32 %v486, %v503
  %v506 = vpack.c.bf16 %v505, %v505
  %v508 = vsel %vm328, %v506, 0
  %510 = vmatpush.bf16.msra.mxu0 0
  %511 = vmatpush.bf16.msra.mxu0 0
  %512 = vmatpush.bf16.msra.mxu0 0
  %513 = vmatpush.bf16.msra.mxu0 0
  %514 = vmatpush.bf16.msra.mxu0 %v318
  %515 = vmatpush.bf16.msra.mxu0 %v316
  %516 = vmatpush.bf16.msra.mxu0 %v314
  %517 = vmatpush.bf16.msra.mxu0 %v312
  %518 = vmatmul.bf16.gmra.mxu0 %v508
  %v519 = vpop.f32.mrf.mxu0
  %v520 = vadd.f32 0.0, %v519
  %v521 = vpop.f32.mrf.mxu0
  %522 = vdwg.mxu0
  %523 = vmatpush.bf16.msra.mxu0 0
  %524 = vmatpush.bf16.msra.mxu0 0
  %525 = vmatpush.bf16.msra.mxu0 0
  %526 = vmatpush.bf16.msra.mxu0 0
  %527 = vmatpush.bf16.msra.mxu0 %v319
  %528 = vmatpush.bf16.msra.mxu0 %v317
  %529 = vmatpush.bf16.msra.mxu0 %v315
  %530 = vmatpush.bf16.msra.mxu0 %v313
  %531 = vmatmul.bf16.gmra.mxu0 %v508
  %v532 = vpop.f32.mrf.mxu0
  %v533 = vadd.f32 0.0, %v532
  %v534 = vpop.f32.mrf.mxu0
  %535 = vdwg.mxu0
  %v536 = vadd.f32 %v237, %v520
  %v537 = vadd.f32 %v266, %v533
  %v538 = vxor.u32 %v536, 2147483648
  %v539 = vxor.u32 %v537, 2147483648
  %v540 = vmul.f32 %v538, 1.442695
  %v541 = vpow.pop %v540
  %v542 = vmul.f32 %v539, 1.442695
  %v543 = vpow.pop %v542
  %v544 = vadd.f32 %v541, 1.0
  %v545 = vadd.f32 %v543, 1.0
  %v546 = vrcp.pop %v544
  %v547 = vmul.f32 %v544, %v546
  %v548 = vsub.f32 1.0, %v547
  %v549 = vmul.f32 %v546, %v548
  %v550 = vadd.f32 %v546, %v549
  %vm551 = vweird.f32 %v544
  %vm552 = vweird.f32 %v546
  %vm553 = vmor %vm551, %vm552
  %v554 = vsel %vm553, %v546, %v550
  %v555 = vand.u32 2147483647, %v544
  %vm556 = vcmp.eq.f32.partialorder %v555, 8.507059e+37
  %v557 = vand.u32 %v544, 2147483648
  %v558 = vor.u32 1.1754944e-38, %v557
  %v559 = vsel %vm556, %v558, %v554
  %v560 = vmul.f32 1.0, %v559
  %v561 = vrcp.pop %v545
  %v562 = vmul.f32 %v545, %v561
  %v563 = vsub.f32 1.0, %v562
  %v564 = vmul.f32 %v561, %v563
  %v565 = vadd.f32 %v561, %v564
  %vm566 = vweird.f32 %v545
  %vm567 = vweird.f32 %v561
  %vm568 = vmor %vm566, %vm567
  %v569 = vsel %vm568, %v561, %v565
  %v570 = vand.u32 2147483647, %v545
  %vm571 = vcmp.eq.f32.partialorder %v570, 8.507059e+37
  %v572 = vand.u32 %v545, 2147483648
  %v573 = vor.u32 1.1754944e-38, %v572
  %v574 = vsel %vm571, %v573, %v569
  %v575 = vmul.f32 1.0, %v574
  %v576 = vmul.f32 %v575, 2.0
  %v577 = vsub.f32 %v576, 1.0
  %v578 = vmul.f32 %v560, %v499
  %580 = vrot.lane.b32.xlu0 %v577, 64
  %v581 = vpop.permute.xlu0 %580
  %v583 = vmul.f32 %v560, %v581
  %585 = vrot.lane.b32.xlu0 %v583, 64
  %v586 = vpop.permute.xlu0 %585
  %v588 = vadd.f32 %v578, %v586
  %v589 = vtanh.pop %v588
  %591 = vrot.lane.b32.xlu0 %v589, 64
  %v592 = vpop.permute.xlu0 %591
  %v594 = vmul.f32 %v575, %v592
  %v595 = vpack.c.bf16 %v594, %v594
  %v597 = vsel %vm328, %v595, 0
  %599 = vmatpush.bf16.msra.mxu0 0
  %600 = vmatpush.bf16.msra.mxu0 0
  %601 = vmatpush.bf16.msra.mxu0 0
  %602 = vmatpush.bf16.msra.mxu0 0
  %603 = vmatpush.bf16.msra.mxu0 %v318
  %604 = vmatpush.bf16.msra.mxu0 %v316
  %605 = vmatpush.bf16.msra.mxu0 %v314
  %606 = vmatpush.bf16.msra.mxu0 %v312
  %607 = vmatmul.bf16.gmra.mxu0 %v597
  %v608 = vpop.f32.mrf.mxu0
  %v609 = vadd.f32 0.0, %v608
  %v610 = vpop.f32.mrf.mxu0
  %611 = vdwg.mxu0
  %612 = vmatpush.bf16.msra.mxu0 0
  %613 = vmatpush.bf16.msra.mxu0 0
  %614 = vmatpush.bf16.msra.mxu0 0
  %615 = vmatpush.bf16.msra.mxu0 0
  %616 = vmatpush.bf16.msra.mxu0 %v319
  %617 = vmatpush.bf16.msra.mxu0 %v317
  %618 = vmatpush.bf16.msra.mxu0 %v315
  %619 = vmatpush.bf16.msra.mxu0 %v313
  %620 = vmatmul.bf16.gmra.mxu0 %v597
  %v621 = vpop.f32.mrf.mxu0
  %v622 = vadd.f32 0.0, %v621
  %v623 = vpop.f32.mrf.mxu0
  %624 = vdwg.mxu0
  %v625 = vadd.f32 %v239, %v609
  %v626 = vadd.f32 %v268, %v622
  %v627 = vxor.u32 %v625, 2147483648
  %v628 = vxor.u32 %v626, 2147483648
  %v629 = vmul.f32 %v627, 1.442695
  %v630 = vpow.pop %v629
  %v631 = vmul.f32 %v628, 1.442695
  %v632 = vpow.pop %v631
  %v633 = vadd.f32 %v630, 1.0
  %v634 = vadd.f32 %v632, 1.0
  %v635 = vrcp.pop %v633
  %v636 = vmul.f32 %v633, %v635
  %v637 = vsub.f32 1.0, %v636
  %v638 = vmul.f32 %v635, %v637
  %v639 = vadd.f32 %v635, %v638
  %vm640 = vweird.f32 %v633
  %vm641 = vweird.f32 %v635
  %vm642 = vmor %vm640, %vm641
  %v643 = vsel %vm642, %v635, %v639
  %v644 = vand.u32 2147483647, %v633
  %vm645 = vcmp.eq.f32.partialorder %v644, 8.507059e+37
  %v646 = vand.u32 %v633, 2147483648
  %v647 = vor.u32 1.1754944e-38, %v646
  %v648 = vsel %vm645, %v647, %v643
  %v649 = vmul.f32 1.0, %v648
  %v650 = vrcp.pop %v634
  %v651 = vmul.f32 %v634, %v650
  %v652 = vsub.f32 1.0, %v651
  %v653 = vmul.f32 %v650, %v652
  %v654 = vadd.f32 %v650, %v653
  %vm655 = vweird.f32 %v634
  %vm656 = vweird.f32 %v650
  %vm657 = vmor %vm655, %vm656
  %v658 = vsel %vm657, %v650, %v654
  %v659 = vand.u32 2147483647, %v634
  %vm660 = vcmp.eq.f32.partialorder %v659, 8.507059e+37
  %v661 = vand.u32 %v634, 2147483648
  %v662 = vor.u32 1.1754944e-38, %v661
  %v663 = vsel %vm660, %v662, %v658
  %v664 = vmul.f32 1.0, %v663
  %v665 = vmul.f32 %v664, 2.0
  %v666 = vsub.f32 %v665, 1.0
  %v667 = vmul.f32 %v649, %v588
  %669 = vrot.lane.b32.xlu0 %v666, 64
  %v670 = vpop.permute.xlu0 %669
  %v672 = vmul.f32 %v649, %v670
  %674 = vrot.lane.b32.xlu0 %v672, 64
  %v675 = vpop.permute.xlu0 %674
  %v677 = vadd.f32 %v667, %v675
  %v678 = vtanh.pop %v677
  %680 = vrot.lane.b32.xlu0 %v678, 64
  %v681 = vpop.permute.xlu0 %680
  %v683 = vmul.f32 %v664, %v681
  %v684 = vpack.c.bf16 %v683, %v683
  %v686 = vsel %vm328, %v684, 0
  %688 = vmatpush.bf16.msra.mxu0 0
  %689 = vmatpush.bf16.msra.mxu0 0
  %690 = vmatpush.bf16.msra.mxu0 0
  %691 = vmatpush.bf16.msra.mxu0 0
  %692 = vmatpush.bf16.msra.mxu0 %v318
  %693 = vmatpush.bf16.msra.mxu0 %v316
  %694 = vmatpush.bf16.msra.mxu0 %v314
  %695 = vmatpush.bf16.msra.mxu0 %v312
  %696 = vmatmul.bf16.gmra.mxu0 %v686
  %v697 = vpop.f32.mrf.mxu0
  %v698 = vadd.f32 0.0, %v697
  %v699 = vpop.f32.mrf.mxu0
  %700 = vdwg.mxu0
  %701 = vmatpush.bf16.msra.mxu0 0
  %702 = vmatpush.bf16.msra.mxu0 0
  %703 = vmatpush.bf16.msra.mxu0 0
  %704 = vmatpush.bf16.msra.mxu0 0
  %705 = vmatpush.bf16.msra.mxu0 %v319
  %706 = vmatpush.bf16.msra.mxu0 %v317
  %707 = vmatpush.bf16.msra.mxu0 %v315
  %708 = vmatpush.bf16.msra.mxu0 %v313
  %709 = vmatmul.bf16.gmra.mxu0 %v686
  %v710 = vpop.f32.mrf.mxu0
  %v711 = vadd.f32 0.0, %v710
  %v712 = vpop.f32.mrf.mxu0
  %713 = vdwg.mxu0
  %v714 = vadd.f32 %v242, %v698
  %v715 = vadd.f32 %v271, %v711
  %v716 = vxor.u32 %v714, 2147483648
  %v717 = vxor.u32 %v715, 2147483648
  %v718 = vmul.f32 %v716, 1.442695
  %v719 = vpow.pop %v718
  %v720 = vmul.f32 %v717, 1.442695
  %v721 = vpow.pop %v720
  %v722 = vadd.f32 %v719, 1.0
  %v723 = vadd.f32 %v721, 1.0
  %v724 = vrcp.pop %v722
  %v725 = vmul.f32 %v722, %v724
  %v726 = vsub.f32 1.0, %v725
  %v727 = vmul.f32 %v724, %v726
  %v728 = vadd.f32 %v724, %v727
  %vm729 = vweird.f32 %v722
  %vm730 = vweird.f32 %v724
  %vm731 = vmor %vm729, %vm730
  %v732 = vsel %vm731, %v724, %v728
  %v733 = vand.u32 2147483647, %v722
  %vm734 = vcmp.eq.f32.partialorder %v733, 8.507059e+37
  %v735 = vand.u32 %v722, 2147483648
  %v736 = vor.u32 1.1754944e-38, %v735
  %v737 = vsel %vm734, %v736, %v732
  %v738 = vmul.f32 1.0, %v737
  %v739 = vrcp.pop %v723
  %v740 = vmul.f32 %v723, %v739
  %v741 = vsub.f32 1.0, %v740
  %v742 = vmul.f32 %v739, %v741
  %v743 = vadd.f32 %v739, %v742
  %vm744 = vweird.f32 %v723
  %vm745 = vweird.f32 %v739
  %vm746 = vmor %vm744, %vm745
  %v747 = vsel %vm746, %v739, %v743
  %v748 = vand.u32 2147483647, %v723
  %vm749 = vcmp.eq.f32.partialorder %v748, 8.507059e+37
  %v750 = vand.u32 %v723, 2147483648
  %v751 = vor.u32 1.1754944e-38, %v750
  %v752 = vsel %vm749, %v751, %v747
  %v753 = vmul.f32 1.0, %v752
  %v754 = vmul.f32 %v753, 2.0
  %v755 = vsub.f32 %v754, 1.0
  %v756 = vmul.f32 %v738, %v677
  %758 = vrot.lane.b32.xlu0 %v755, 64
  %v759 = vpop.permute.xlu0 %758
  %v761 = vmul.f32 %v738, %v759
  %763 = vrot.lane.b32.xlu0 %v761, 64
  %v764 = vpop.permute.xlu0 %763
  %v766 = vadd.f32 %v756, %v764
  %v767 = vtanh.pop %v766
  %769 = vrot.lane.b32.xlu0 %v767, 64
  %v770 = vpop.permute.xlu0 %769
  %v772 = vmul.f32 %v753, %v770
  %v773 = vpack.c.bf16 %v772, %v772
  %v775 = vsel %vm328, %v773, 0
  %777 = vmatpush.bf16.msra.mxu0 0
  %778 = vmatpush.bf16.msra.mxu0 0
  %779 = vmatpush.bf16.msra.mxu0 0
  %780 = vmatpush.bf16.msra.mxu0 0
  %781 = vmatpush.bf16.msra.mxu0 %v318
  %782 = vmatpush.bf16.msra.mxu0 %v316
  %783 = vmatpush.bf16.msra.mxu0 %v314
  %784 = vmatpush.bf16.msra.mxu0 %v312
  %785 = vmatmul.bf16.gmra.mxu0 %v775
  %v786 = vpop.f32.mrf.mxu0
  %v787 = vadd.f32 0.0, %v786
  %v788 = vpop.f32.mrf.mxu0
  %789 = vdwg.mxu0
  %790 = vmatpush.bf16.msra.mxu0 0
  %791 = vmatpush.bf16.msra.mxu0 0
  %792 = vmatpush.bf16.msra.mxu0 0
  %793 = vmatpush.bf16.msra.mxu0 0
  %794 = vmatpush.bf16.msra.mxu0 %v319
  %795 = vmatpush.bf16.msra.mxu0 %v317
  %796 = vmatpush.bf16.msra.mxu0 %v315
  %797 = vmatpush.bf16.msra.mxu0 %v313
  %798 = vmatmul.bf16.gmra.mxu0 %v775
  %v799 = vpop.f32.mrf.mxu0
  %v800 = vadd.f32 0.0, %v799
  %v801 = vpop.f32.mrf.mxu0
  %802 = vdwg.mxu0
  %v803 = vadd.f32 %v244, %v787
  %v804 = vadd.f32 %v273, %v800
  %v805 = vxor.u32 %v803, 2147483648
  %v806 = vxor.u32 %v804, 2147483648
  %v807 = vmul.f32 %v805, 1.442695
  %v808 = vpow.pop %v807
  %v809 = vmul.f32 %v806, 1.442695
  %v810 = vpow.pop %v809
  %v811 = vadd.f32 %v808, 1.0
  %v812 = vadd.f32 %v810, 1.0
  %v813 = vrcp.pop %v811
  %v814 = vmul.f32 %v811, %v813
  %v815 = vsub.f32 1.0, %v814
  %v816 = vmul.f32 %v813, %v815
  %v817 = vadd.f32 %v813, %v816
  %vm818 = vweird.f32 %v811
  %vm819 = vweird.f32 %v813
  %vm820 = vmor %vm818, %vm819
  %v821 = vsel %vm820, %v813, %v817
  %v822 = vand.u32 2147483647, %v811
  %vm823 = vcmp.eq.f32.partialorder %v822, 8.507059e+37
  %v824 = vand.u32 %v811, 2147483648
  %v825 = vor.u32 1.1754944e-38, %v824
  %v826 = vsel %vm823, %v825, %v821
  %v827 = vmul.f32 1.0, %v826
  %v828 = vrcp.pop %v812
  %v829 = vmul.f32 %v812, %v828
  %v830 = vsub.f32 1.0, %v829
  %v831 = vmul.f32 %v828, %v830
  %v832 = vadd.f32 %v828, %v831
  %vm833 = vweird.f32 %v812
  %vm834 = vweird.f32 %v828
  %vm835 = vmor %vm833, %vm834
  %v836 = vsel %vm835, %v828, %v832
  %v837 = vand.u32 2147483647, %v812
  %vm838 = vcmp.eq.f32.partialorder %v837, 8.507059e+37
  %v839 = vand.u32 %v812, 2147483648
  %v840 = vor.u32 1.1754944e-38, %v839
  %v841 = vsel %vm838, %v840, %v836
  %v842 = vmul.f32 1.0, %v841
  %v843 = vmul.f32 %v842, 2.0
  %v844 = vsub.f32 %v843, 1.0
  %v845 = vmul.f32 %v827, %v766
  %847 = vrot.lane.b32.xlu0 %v844, 64
  %v848 = vpop.permute.xlu0 %847
  %v850 = vmul.f32 %v827, %v848
  %852 = vrot.lane.b32.xlu0 %v850, 64
  %v853 = vpop.permute.xlu0 %852
  %v855 = vadd.f32 %v845, %v853
  %v856 = vtanh.pop %v855
  %858 = vrot.lane.b32.xlu0 %v856, 64
  %v859 = vpop.permute.xlu0 %858
  %v861 = vmul.f32 %v842, %v859
  %v862 = vpack.c.bf16 %v861, %v861
  %v864 = vsel %vm328, %v862, 0
  %866 = vmatpush.bf16.msra.mxu0 0
  %867 = vmatpush.bf16.msra.mxu0 0
  %868 = vmatpush.bf16.msra.mxu0 0
  %869 = vmatpush.bf16.msra.mxu0 0
  %870 = vmatpush.bf16.msra.mxu0 %v318
  %871 = vmatpush.bf16.msra.mxu0 %v316
  %872 = vmatpush.bf16.msra.mxu0 %v314
  %873 = vmatpush.bf16.msra.mxu0 %v312
  %874 = vmatmul.bf16.gmra.mxu0 %v864
  %v875 = vpop.f32.mrf.mxu0
  %v876 = vadd.f32 0.0, %v875
  %v877 = vpop.f32.mrf.mxu0
  %878 = vdwg.mxu0
  %879 = vmatpush.bf16.msra.mxu0 0
  %880 = vmatpush.bf16.msra.mxu0 0
  %881 = vmatpush.bf16.msra.mxu0 0
  %882 = vmatpush.bf16.msra.mxu0 0
  %883 = vmatpush.bf16.msra.mxu0 %v319
  %884 = vmatpush.bf16.msra.mxu0 %v317
  %885 = vmatpush.bf16.msra.mxu0 %v315
  %886 = vmatpush.bf16.msra.mxu0 %v313
  %887 = vmatmul.bf16.gmra.mxu0 %v864
  %v888 = vpop.f32.mrf.mxu0
  %v889 = vadd.f32 0.0, %v888
  %v890 = vpop.f32.mrf.mxu0
  %891 = vdwg.mxu0
  %v892 = vadd.f32 %v247, %v876
  %v893 = vadd.f32 %v276, %v889
  %v894 = vxor.u32 %v892, 2147483648
  %v895 = vxor.u32 %v893, 2147483648
  %v896 = vmul.f32 %v894, 1.442695
  %v897 = vpow.pop %v896
  %v898 = vmul.f32 %v895, 1.442695
  %v899 = vpow.pop %v898
  %v900 = vadd.f32 %v897, 1.0
  %v901 = vadd.f32 %v899, 1.0
  %v902 = vrcp.pop %v900
  %v903 = vmul.f32 %v900, %v902
  %v904 = vsub.f32 1.0, %v903
  %v905 = vmul.f32 %v902, %v904
  %v906 = vadd.f32 %v902, %v905
  %vm907 = vweird.f32 %v900
  %vm908 = vweird.f32 %v902
  %vm909 = vmor %vm907, %vm908
  %v910 = vsel %vm909, %v902, %v906
  %v911 = vand.u32 2147483647, %v900
  %vm912 = vcmp.eq.f32.partialorder %v911, 8.507059e+37
  %v913 = vand.u32 %v900, 2147483648
  %v914 = vor.u32 1.1754944e-38, %v913
  %v915 = vsel %vm912, %v914, %v910
  %v916 = vmul.f32 1.0, %v915
  %v917 = vrcp.pop %v901
  %v918 = vmul.f32 %v901, %v917
  %v919 = vsub.f32 1.0, %v918
  %v920 = vmul.f32 %v917, %v919
  %v921 = vadd.f32 %v917, %v920
  %vm922 = vweird.f32 %v901
  %vm923 = vweird.f32 %v917
  %vm924 = vmor %vm922, %vm923
  %v925 = vsel %vm924, %v917, %v921
  %v926 = vand.u32 2147483647, %v901
  %vm927 = vcmp.eq.f32.partialorder %v926, 8.507059e+37
  %v928 = vand.u32 %v901, 2147483648
  %v929 = vor.u32 1.1754944e-38, %v928
  %v930 = vsel %vm927, %v929, %v925
  %v931 = vmul.f32 1.0, %v930
  %v932 = vmul.f32 %v931, 2.0
  %v933 = vsub.f32 %v932, 1.0
  %v934 = vmul.f32 %v916, %v855
  %936 = vrot.lane.b32.xlu0 %v933, 64
  %v937 = vpop.permute.xlu0 %936
  %v939 = vmul.f32 %v916, %v937
  %941 = vrot.lane.b32.xlu0 %v939, 64
  %v942 = vpop.permute.xlu0 %941
  %v944 = vadd.f32 %v934, %v942
  %v945 = vtanh.pop %v944
  %947 = vrot.lane.b32.xlu0 %v945, 64
  %v948 = vpop.permute.xlu0 %947
  %v950 = vmul.f32 %v931, %v948
  %v951 = vpack.c.bf16 %v950, %v950
  %v953 = vsel %vm328, %v951, 0
  %955 = vmatpush.bf16.msra.mxu0 0
  %956 = vmatpush.bf16.msra.mxu0 0
  %957 = vmatpush.bf16.msra.mxu0 0
  %958 = vmatpush.bf16.msra.mxu0 0
  %959 = vmatpush.bf16.msra.mxu0 %v318
  %960 = vmatpush.bf16.msra.mxu0 %v316
  %961 = vmatpush.bf16.msra.mxu0 %v314
  %962 = vmatpush.bf16.msra.mxu0 %v312
  %963 = vmatmul.bf16.gmra.mxu0 %v953
  %v964 = vpop.f32.mrf.mxu0
  %v965 = vadd.f32 0.0, %v964
  %v966 = vpop.f32.mrf.mxu0
  %967 = vdwg.mxu0
  %968 = vmatpush.bf16.msra.mxu0 0
  %969 = vmatpush.bf16.msra.mxu0 0
  %970 = vmatpush.bf16.msra.mxu0 0
  %971 = vmatpush.bf16.msra.mxu0 0
  %972 = vmatpush.bf16.msra.mxu0 %v319
  %973 = vmatpush.bf16.msra.mxu0 %v317
  %974 = vmatpush.bf16.msra.mxu0 %v315
  %975 = vmatpush.bf16.msra.mxu0 %v313
  %976 = vmatmul.bf16.gmra.mxu0 %v953
  %v977 = vpop.f32.mrf.mxu0
  %v978 = vadd.f32 0.0, %v977
  %v979 = vpop.f32.mrf.mxu0
  %980 = vdwg.mxu0
  %v981 = vadd.f32 %v249, %v965
  %v982 = vadd.f32 %v278, %v978
  %v983 = vxor.u32 %v981, 2147483648
  %v984 = vxor.u32 %v982, 2147483648
  %v985 = vmul.f32 %v983, 1.442695
  %v986 = vpow.pop %v985
  %v987 = vmul.f32 %v984, 1.442695
  %v988 = vpow.pop %v987
  %v989 = vadd.f32 %v986, 1.0
  %v990 = vadd.f32 %v988, 1.0
  %v991 = vrcp.pop %v989
  %v992 = vmul.f32 %v989, %v991
  %v993 = vsub.f32 1.0, %v992
  %v994 = vmul.f32 %v991, %v993
  %v995 = vadd.f32 %v991, %v994
  %vm996 = vweird.f32 %v989
  %vm997 = vweird.f32 %v991
  %vm998 = vmor %vm996, %vm997
  %v999 = vsel %vm998, %v991, %v995
  %v1000 = vand.u32 2147483647, %v989
  %vm1001 = vcmp.eq.f32.partialorder %v1000, 8.507059e+37
  %v1002 = vand.u32 %v989, 2147483648
  %v1003 = vor.u32 1.1754944e-38, %v1002
  %v1004 = vsel %vm1001, %v1003, %v999
  %v1005 = vmul.f32 1.0, %v1004
  %v1006 = vrcp.pop %v990
  %v1007 = vmul.f32 %v990, %v1006
  %v1008 = vsub.f32 1.0, %v1007
  %v1009 = vmul.f32 %v1006, %v1008
  %v1010 = vadd.f32 %v1006, %v1009
  %vm1011 = vweird.f32 %v990
  %vm1012 = vweird.f32 %v1006
  %vm1013 = vmor %vm1011, %vm1012
  %v1014 = vsel %vm1013, %v1006, %v1010
  %v1015 = vand.u32 2147483647, %v990
  %vm1016 = vcmp.eq.f32.partialorder %v1015, 8.507059e+37
  %v1017 = vand.u32 %v990, 2147483648
  %v1018 = vor.u32 1.1754944e-38, %v1017
  %v1019 = vsel %vm1016, %v1018, %v1014
  %v1020 = vmul.f32 1.0, %v1019
  %v1021 = vmul.f32 %v1020, 2.0
  %v1022 = vsub.f32 %v1021, 1.0
  %v1023 = vmul.f32 %v1005, %v944
  %1025 = vrot.lane.b32.xlu0 %v1022, 64
  %v1026 = vpop.permute.xlu0 %1025
  %v1028 = vmul.f32 %v1005, %v1026
  %1030 = vrot.lane.b32.xlu0 %v1028, 64
  %v1031 = vpop.permute.xlu0 %1030
  %v1033 = vadd.f32 %v1023, %v1031
  %v1034 = vtanh.pop %v1033
  %1036 = vrot.lane.b32.xlu0 %v1034, 64
  %v1037 = vpop.permute.xlu0 %1036
  %v1039 = vmul.f32 %v1020, %v1037
  %v1040 = vpack.c.bf16 %v1039, %v1039
  %v1041 = vld [vmem:[%s4] sm:$0xf]
  %v1042 = vld [vmem:[%s4 + $0x4] sm:$0xf]
  %v1043 = vld [vmem:[%s4 + $0x8] sm:$0xf]
  %v1044 = vld [vmem:[%s4 + $0xc] sm:$0xf]
  %v1045 = vld [vmem:[%s4 + $0x10] sm:$0xf]
  %v1046 = vld [vmem:[%s4 + $0x14] sm:$0xf]
  %v1047 = vld [vmem:[%s4 + $0x18] sm:$0xf]
  %v1048 = vld [vmem:[%s4 + $0x1c] sm:$0xf]
  %v1049 = vld [vmem:[%s5] sm:$0x1]
  %v1051 = vperm.slane %v1049, 0
  %v1061 = vunpack.c.l.b16 %v1041
  %v1062 = vunpack.c.l.b16 %v1042
  %v1063 = vunpack.c.l.b16 %v1043
  %v1064 = vunpack.c.l.b16 %v1044
  %v1065 = vunpack.c.l.b16 %v1045
  %v1066 = vunpack.c.l.b16 %v1046
  %v1067 = vunpack.c.l.b16 %v1047
  %v1068 = vunpack.c.l.b16 %v1048
  %v1069 = vpack.c.b16 %v1062, %v1061
  %v1070 = vpack.c.b16 %v1064, %v1063
  %v1071 = vpack.c.b16 %v1066, %v1065
  %v1072 = vpack.c.b16 %v1068, %v1067
  %v1078 = vsel %vm328, %v1040, 0
  %1080 = vmatpush.bf16.msra.mxu0 0
  %1081 = vmatpush.bf16.msra.mxu0 0
  %1082 = vmatpush.bf16.msra.mxu0 0
  %1083 = vmatpush.bf16.msra.mxu0 0
  %1084 = vmatpush.bf16.msra.mxu0 %v1072
  %1085 = vmatpush.bf16.msra.mxu0 %v1071
  %1086 = vmatpush.bf16.msra.mxu0 %v1070
  %1087 = vmatpush.bf16.msra.mxu0 %v1069
  %1088 = vmatmul.bf16.gmra.mxu0 %v1078
  %v1089 = vpop.f32.mrf.mxu0
  %v1090 = vadd.f32 %v1051, %v1089
  %v1091 = vpop.f32.mrf.mxu0
  %1092 = vdwg.mxu0
  %1093 = vst [vmem:[%s6] sm:$0xff] %v1090
  // Predicated region
  $region26: #{bilstm_forward.1} parent=0 // pred_check
    _
  $region27: #{bilstm_forward.1} parent=0 // pred_check_branch
    %1095 = sbr.rel (0) target = $region29
  $region28: #{bilstm_forward.1} parent=0 // pred_region
    _
  $region29: #{bilstm_forward.1} parent=0 // pred_fallthru
    _
  // Predicated region
  $region30: #{bilstm_forward.1} parent=0 // pred_check
    _
  $region31: #{bilstm_forward.1} parent=0 // pred_check_branch
    %1097 = sbr.rel (0) target = $region33
  $region32: #{bilstm_forward.1} parent=0 // pred_region
    _
  $region33: #{bilstm_forward.1} parent=0 // pred_fallthru
    _

</llo_original>
